<compile_context>
chip_gen: v6e
topology: v6e:2x2x1
jax: 0.10.0
libtpu: 0.0.40
codegen_flags: <defaults>
</compile_context>

<pallas_src>
import jax
import jax.numpy as jnp
from jax.experimental import pallas as pl
from jax.experimental.pallas import tpu as pltpu


# ---------------- simple path kernel: full H*W row per block ----------------

def _inorm_mod_kernel(x_ref, gb_ref, out_ref):
    """Instance norm (per row = per (n,c), biased var, eps=1e-5) + affine modulation.

    x_ref:   (rows, H*W) block, x's native dtype
    gb_ref:  (R_pad, 2)  full array, column 0 = beta, column 1 = gamma (f32)
    out_ref: (rows, H*W) block, x's native dtype
    """
    rows = out_ref.shape[0]
    start = pl.program_id(0) * rows
    if rows % 8 == 0:
        start = pl.multiple_of(start, 8)
    gb = gb_ref[pl.ds(start, rows), :]
    beta = gb[:, 0:1]
    gamma = gb[:, 1:2]

    x = x_ref[...].astype(jnp.float32)
    inv_hw = 1.0 / x.shape[-1]
    mean = jnp.sum(x, axis=-1, keepdims=True) * inv_hw
    d = x - mean                                        # centered tensor, reused for the output
    var = jnp.sum(d * d, axis=-1, keepdims=True) * inv_hw
    inv = jax.lax.rsqrt(var + 1e-5)
    out_ref[...] = (d * (inv * gamma) + beta).astype(out_ref.dtype)


# ---------------- chunked path kernel: H*W split into lane chunks ----------------

def _make_chunked_kernel(hw, n_chunks):
    """Grid = (row_blocks, 2 phases, hw_chunks).

    Phase 0: per-chunk mean / centered-M2, combined across chunks (parallel Welford) in scratch;
             last chunk finalizes per-row scale/shift.
    Phase 1: re-stream x and write out = x*scale + shift chunk by chunk.
    """
    def kernel(x_ref, gb_ref, out_ref, mean_ref, m2_ref, scale_ref, shift_ref):
        i = pl.program_id(0)
        p = pl.program_id(1)
        k = pl.program_id(2)
        rows = out_ref.shape[0]
        chunk = out_ref.shape[1]

        @pl.when(p == 0)
        def _stats():
            x = x_ref[...].astype(jnp.float32)
            base = k * chunk
            col = jax.lax.broadcasted_iota(jnp.int32, x.shape, 1) + base
            valid = col < hw                                   # mask the padded tail chunk
            n_b = jnp.minimum(chunk, hw - base).astype(jnp.float32)
            xm = jnp.where(valid, x, 0.0)
            mean_b = jnp.sum(xm, axis=-1, keepdims=True) / n_b
            d = jnp.where(valid, x - mean_b, 0.0)
            m2_b = jnp.sum(d * d, axis=-1, keepdims=True)

            @pl.when(k == 0)
            def _():
                mean_ref[...] = mean_b
                m2_ref[...] = m2_b

            @pl.when(k > 0)
            def _():
                n_a = base.astype(jnp.float32)                  # columns already accumulated
                n_tot = n_a + n_b
                delta = mean_b - mean_ref[...]
                mean_ref[...] = mean_ref[...] + delta * (n_b / n_tot)
                m2_ref[...] = m2_ref[...] + m2_b + (delta * delta) * (n_a * n_b / n_tot)

            @pl.when(k == n_chunks - 1)
            def _():
                start = i * rows
                if rows % 8 == 0:
                    start = pl.multiple_of(start, 8)
                gb = gb_ref[pl.ds(start, rows), :]
                beta = gb[:, 0:1]
                gamma = gb[:, 1:2]
                var = m2_ref[...] * (1.0 / hw)                  # biased variance (InstanceNorm2d)
                inv = jax.lax.rsqrt(var + 1e-5)
                scale_ref[...] = inv * gamma
                shift_ref[...] = beta - mean_ref[...] * (inv * gamma)

        @pl.when(p == 1)
        def _write():
            x = x_ref[...].astype(jnp.float32)
            out_ref[...] = (x * scale_ref[...] + shift_ref[...]).astype(out_ref.dtype)

    return kernel


# ---------------- sizing helpers ----------------

def _vmem_capacity_bytes():
    try:
        return int(pltpu.get_tpu_info().vmem_capacity_bytes)
    except Exception:
        return 64 << 20   # conservative default (v7x per-TC VMEM)


# ---------------- params / wrapper ----------------

def make_params(in_nc, out_nc, key):
    """MLP(2*in_nc -> 2*out_nc, hidden=2*in_nc, n_blk=3). Weights stored as (in, out)."""
    d_in, d_hid, d_out = 2 * in_nc, 2 * in_nc, 2 * out_nc
    ks = jax.random.split(key, 6)
    w1 = 0.1 * jax.random.normal(ks[0], (d_in, d_hid), jnp.float32)
    b1 = 0.1 * jax.random.normal(ks[1], (1, d_hid), jnp.float32)
    w2 = 0.1 * jax.random.normal(ks[2], (d_hid, d_hid), jnp.float32)
    b2 = 0.1 * jax.random.normal(ks[3], (1, d_hid), jnp.float32)
    w3 = 0.1 * jax.random.normal(ks[4], (d_hid, d_out), jnp.float32)
    b3 = 0.1 * jax.random.normal(ks[5], (1, d_out), jnp.float32)
    return (w1, b1, w2, b2, w3, b3)


def sm_res_block(x, statistics_code, params, *, force_hw_chunk=None):
    N, C, H, W = x.shape
    n, c, h, w = statistics_code.shape
    w1, b1, w2, b2, w3, b3 = params
    assert n == N, "batch mismatch between x and statistics_code"
    # The gamma/beta packing below assumes the (h, w) layout used by SMResBlock.
    assert h == 1 and w == 2, (
        f"statistics_code must have shape (n, C, 1, 2); got (h, w) = ({h}, {w})")

    # ---- tiny 3-layer MLP in plain JAX (an MXU Pallas kernel would be <1% utilized)
    s = statistics_code.reshape(n, c * h * w).astype(jnp.float32)
    s = jnp.maximum(s @ w1 + b1, 0.0)
    s = jnp.maximum(s @ w2 + b2, 0.0)
    s = s @ w3 + b3                                   # (n, 2*out_nc)
    sc = s.reshape(n, -1, h, w)                       # (n, out_nc, 1, 2)
    out_nc = sc.shape[1]
    assert out_nc == C, (
        f"SMResBlock modulation requires out_nc == in_nc (got out_nc={out_nc}, C={C})")
    # Pack (beta, gamma) per (n, channel): column 0 = beta, column 1 = gamma
    gb = sc[:, :, 0, :].reshape(n * out_nc, 2).astype(jnp.float32)

    # ---- fused instance-norm + modulation on (N*C, H*W)
    total_rows, hw = N * C, H * W
    x2 = x.reshape(total_rows, hw)                    # native dtype in / native dtype out
    itemsize = jnp.dtype(x.dtype).itemsize

    cap = _vmem_capacity_bytes()
    budget = (cap * 3) // 4                           # leave VMEM headroom for the compiler
    # resident bytes per row of a block: 2x in + 2x out (double-buffered, native) + ~2 f32 temps
    per_row_bytes = hw * (4 * itemsize + 8)
    rows_budget = budget // per_row_bytes if per_row_bytes > 0 else budget

    use_chunked = (force_hw_chunk is not None) or (rows_budget < 8)

    if not use_chunked:
        # ---------- simple path: full H*W row on the lane axis, tiled over rows ----------
        rows = min((int(rows_budget) // 8) * 8, 32768)
        if total_rows >= 16:
            # at least 2 grid steps so both v7x TensorCores get work
            rows = min(rows, max(8, ((total_rows // 2) // 8) * 8))
        if rows >= total_rows:
            rows = total_rows                          # single full block (full dim is legal)
        num_blocks = pl.cdiv(total_rows, rows)
        r_pad = num_blocks * rows
        if r_pad > total_rows:
            gb = jnp.pad(gb, ((0, r_pad - total_rows), (0, 0)))

        resident = 4 * rows * hw * itemsize + 2 * rows * hw * 4 + r_pad * 512
        vmem_limit = int(min(cap, max(32 << 20, resident + (4 << 20))))

        out = pl.pallas_call(
            _inorm_mod_kernel,
            out_shape=jax.ShapeDtypeStruct((total_rows, hw), x.dtype),
            grid=(num_blocks,),
            in_specs=[
                pl.BlockSpec((rows, hw), lambda i: (i, 0)),
                pl.BlockSpec((r_pad, 2), lambda i: (0, 0)),   # loaded once, sliced in-kernel
            ],
            out_specs=pl.BlockSpec((rows, hw), lambda i: (i, 0)),
            input_output_aliases={0: 0},
            compiler_params=pltpu.CompilerParams(
                dimension_semantics=("parallel",),
                vmem_limit_bytes=vmem_limit,
            ),
            cost_estimate=pl.CostEstimate(
                flops=7 * total_rows * hw,
                transcendentals=total_rows,
                bytes_accessed=2 * total_rows * hw * itemsize + gb.size * 4,
            ),
        )(x2, gb)
    else:
        # ---------- chunked path: H*W too large for one VMEM row block ----------
        rows = 8 if total_rows >= 8 else total_rows
        if force_hw_chunk is not None:
            chunk = int(force_hw_chunk)
        else:
            chunk = budget // (rows * (4 * itemsize + 8))
            chunk = max(128, (chunk // 128) * 128)
        chunk = min(chunk, hw)
        assert chunk == hw or chunk % 128 == 0, "hw chunk must be a multiple of 128 (or == H*W)"
        n_chunks = pl.cdiv(hw, chunk)
        num_row_blocks = pl.cdiv(total_rows, rows)
        r_pad = num_row_blocks * rows
        if r_pad > total_rows:
            gb = jnp.pad(gb, ((0, r_pad - total_rows), (0, 0)))

        resident = 4 * rows * chunk * itemsize + 2 * rows * chunk * 4 + r_pad * 512
        vmem_limit = int(min(cap, max(32 << 20, resident + (4 << 20))))

        kernel = _make_chunked_kernel(hw, n_chunks)
        out = pl.pallas_call(
            kernel,
            out_shape=jax.ShapeDtypeStruct((total_rows, hw), x.dtype),
            grid=(num_row_blocks, 2, n_chunks),
            in_specs=[
                pl.BlockSpec((rows, chunk), lambda i, p, k: (i, k)),
                pl.BlockSpec((r_pad, 2), lambda i, p, k: (0, 0)),
            ],
            # phase 0: park on chunk 0 (never written -> never flushed);
            # phase 1: walk the chunks and write each exactly once.
            out_specs=pl.BlockSpec((rows, chunk), lambda i, p, k: (i, p * k)),
            scratch_shapes=[pltpu.VMEM((rows, 1), jnp.float32)] * 4,
            input_output_aliases={0: 0},
            compiler_params=pltpu.CompilerParams(
                dimension_semantics=("parallel", "arbitrary", "arbitrary"),
                vmem_limit_bytes=vmem_limit,
            ),
            cost_estimate=pl.CostEstimate(
                flops=9 * total_rows * hw,
                transcendentals=total_rows,
                bytes_accessed=3 * total_rows * hw * itemsize + gb.size * 4,
            ),
        )(x2, gb)

    return out.reshape(N, C, H, W)


# ---------------- pure-JAX reference (correctness check) ----------------

def sm_res_block_ref(x, statistics_code, params):
    N, C, H, W = x.shape
    n, c, h, w = statistics_code.shape
    w1, b1, w2, b2, w3, b3 = params
    s = statistics_code.reshape(n, -1)
    s = jnp.maximum(s @ w1 + b1, 0.0)
    s = jnp.maximum(s @ w2 + b2, 0.0)
    s = s @ w3 + b3
    sc = s.reshape(n, -1, h, w)
    gamma = sc[:, :, :, 1][..., None]                 # (n, out_nc, 1, 1)
    beta = sc[:, :, :, 0][..., None]
    xf = x.astype(jnp.float32)
    mean = xf.mean(axis=(2, 3), keepdims=True)
    var = ((xf - mean) ** 2).mean(axis=(2, 3), keepdims=True)
    normalized = (xf - mean) / jnp.sqrt(var + 1e-5)
    return (normalized * gamma + beta).astype(x.dtype)


if __name__ == "__main__":
    in_nc = out_nc = 4
    key = jax.random.PRNGKey(0)
    k_x, k_s, k_p, k_x2, k_s2 = jax.random.split(key, 5)
    params = make_params(in_nc, out_nc, k_p)

    # --- test 1: simple path, single block ---
    N, H, W = 2, 16, 16
    x = jax.random.normal(k_x, (N, in_nc, H, W), jnp.float32)
    statistics_code = jax.random.normal(k_s, (N, in_nc, 1, 2), jnp.float32)
    out = jax.block_until_ready(sm_res_block(x, statistics_code, params))
    ref = sm_res_block_ref(x, statistics_code, params)
    assert out.shape == (N, out_nc, H, W)
    assert jnp.allclose(out, ref, atol=1e-4, rtol=1e-4)

    # --- test 2: simple path, multiple row blocks (exercises in-kernel gamma/beta slicing) ---
    N2, H2, W2 = 4, 16, 16
    x_b = jax.random.normal(k_x2, (N2, in_nc, H2, W2), jnp.float32)
    sc_b = jax.random.normal(k_s2, (N2, in_nc, 1, 2), jnp.float32)
    out_b = jax.block_until_ready(sm_res_block(x_b, sc_b, params))
    ref_b = sm_res_block_ref(x_b, sc_b, params)
    assert jnp.allclose(out_b, ref_b, atol=1e-4, rtol=1e-4)

    # --- test 3: H*W-chunked fallback (forced small chunk; hw=320 -> masked partial chunk) ---
    N3, H3, W3 = 4, 16, 20
    x_c = jax.random.normal(k_x, (N3, in_nc, H3, W3), jnp.float32)
    sc_c = jax.random.normal(k_s, (N3, in_nc, 1, 2), jnp.float32)
    out_c = jax.block_until_ready(sm_res_block(x_c, sc_c, params, force_hw_chunk=128))
    ref_c = sm_res_block_ref(x_c, sc_c, params)
    assert jnp.allclose(out_c, ref_c, atol=1e-4, rtol=1e-4)

    print("KERNEL_OK")
</pallas_src>

<mosaic_0001>
module attributes {stable_mosaic.version = 11 : i64} {
  func.func @_inorm_mod_kernel(%arg0: i32, %arg1: memref<8x256xf32, #tpu.memory_space<vmem>>, %arg2: memref<8x2xf32, #tpu.memory_space<vmem>>, %arg3: memref<8x256xf32, #tpu.memory_space<vmem>>) attributes {dimension_semantics = [#tpu.dimension_semantics<parallel>], iteration_bounds = array<i64: 1>, scalar_prefetch = 0 : i64, scratch_operands = 0 : i64, tpu.core_type = #tpu.core_type<tc>, window_params = [{transform_indices = @transform_0, window_bounds = array<i64: 8, 256>}, {pipeline_mode = #tpu.pipeline_mode<synchronous>, transform_indices = @transform_1, window_bounds = array<i64: 8, 2>}, {transform_indices = @transform_2, window_bounds = array<i64: 8, 256>}]} {
    %c8_i32 = arith.constant 8 : i32
    %0 = arith.muli %arg0, %c8_i32 : i32
    %1 = tpu.assume_multiple %0, 8 : i32
    %2 = arith.index_cast %1 : i32 to index
    %c0 = arith.constant 0 : index
    %3 = vector.load %arg2[%2, %c0] : memref<8x2xf32, #tpu.memory_space<vmem>>, vector<8x2xf32>
    %4 = vector.extract_strided_slice %3 {offsets = [0, 0], sizes = [8, 1], strides = [1, 1]} : vector<8x2xf32> to vector<8x1xf32>
    %5 = vector.extract_strided_slice %3 {offsets = [0, 1], sizes = [8, 1], strides = [1, 1]} : vector<8x2xf32> to vector<8x1xf32>
    %c0_0 = arith.constant 0 : index
    %c0_1 = arith.constant 0 : index
    %6 = vector.load %arg1[%c0_0, %c0_1] : memref<8x256xf32, #tpu.memory_space<vmem>>, vector<8x256xf32>
    %cst = arith.constant dense<0.000000e+00> : vector<8xf32>
    %7 = vector.multi_reduction <add>, %6, %cst [1] : vector<8x256xf32> to vector<8xf32>
    %8 = vector.shape_cast %7 : vector<8xf32> to vector<8x1xf32>
    %cst_2 = arith.constant 3.906250e-03 : f32
    %9 = vector.broadcast %cst_2 : f32 to vector<8x1xf32>
    %10 = arith.mulf %8, %9 : vector<8x1xf32>
    %11 = vector.broadcast %10 : vector<8x1xf32> to vector<8x256xf32>
    %12 = arith.subf %6, %11 : vector<8x256xf32>
    %13 = arith.mulf %12, %12 : vector<8x256xf32>
    %cst_3 = arith.constant dense<0.000000e+00> : vector<8xf32>
    %14 = vector.multi_reduction <add>, %13, %cst_3 [1] : vector<8x256xf32> to vector<8xf32>
    %15 = vector.shape_cast %14 : vector<8xf32> to vector<8x1xf32>
    %cst_4 = arith.constant 3.906250e-03 : f32
    %16 = vector.broadcast %cst_4 : f32 to vector<8x1xf32>
    %17 = arith.mulf %15, %16 : vector<8x1xf32>
    %cst_5 = arith.constant 9.99999974E-6 : f32
    %18 = vector.broadcast %cst_5 : f32 to vector<8x1xf32>
    %19 = arith.addf %17, %18 : vector<8x1xf32>
    %20 = math.rsqrt %19 : vector<8x1xf32>
    %21 = arith.mulf %20, %5 : vector<8x1xf32>
    %22 = vector.broadcast %21 : vector<8x1xf32> to vector<8x256xf32>
    %23 = arith.mulf %12, %22 : vector<8x256xf32>
    %24 = vector.broadcast %4 : vector<8x1xf32> to vector<8x256xf32>
    %25 = arith.addf %23, %24 : vector<8x256xf32>
    %c0_6 = arith.constant 0 : index
    %c0_7 = arith.constant 0 : index
    %26 = vector.load %arg3[%c0_6, %c0_7] : memref<8x256xf32, #tpu.memory_space<vmem>>, vector<8x256xf32>
    tpu.vector_store %arg3[%c0_6, %c0_7], %25 {strides = array<i32>} : memref<8x256xf32, #tpu.memory_space<vmem>>, vector<8x256xf32>,
    return
  }
  func.func @transform_0(%arg0: i32) -> (i32, i32) {
    %c0_i32 = arith.constant 0 : i32
    %c0_i32_0 = arith.constant 0 : i32
    return %arg0, %c0_i32 : i32, i32
  }
  func.func @transform_1(%arg0: i32) -> (i32, i32) {
    %c0_i32 = arith.constant 0 : i32
    %c0_i32_0 = arith.constant 0 : i32
    %c0_i32_1 = arith.constant 0 : i32
    return %c0_i32, %c0_i32_0 : i32, i32
  }
  func.func @transform_2(%arg0: i32) -> (i32, i32) {
    %c0_i32 = arith.constant 0 : i32
    %c0_i32_0 = arith.constant 0 : i32
    return %arg0, %c0_i32 : i32, i32
  }
}

</mosaic_0001>

<llo_original>
// kernel: tpu_custom_call.1
$region0: #{tpu_custom_call.1}
  #allocation0 [shape = 'u32[]', space=smem, size = 0x4, offset = 0x4, fixed_abs, tag = 'smem constant byte address 0x4 - core index']
  #allocation1 [shape = 'u32[144,128]{1,0:T(1,128)}', space=vmem, size = 0x12000, scoped, tag = 'internal scratch']
  %s0 = inlined_call_operand.hbm [shape: f32[8,256], index: 0, kind: input, shape index: {}, may-alias: {0,2}]
  %s1 = inlined_call_operand.vmem [shape: f32[8,2], index: 1, kind: input, shape index: {}]
  %s2 = inlined_call_operand.hbm [shape: f32[8,256], index: 2, kind: output, shape index: {}, may-alias: {0,2}]
  %s3 = sld [smem:[#allocation0]]
  $region22: #{tpu_custom_call.1} parent=0
    _
  %s5 = ssub.s32 1, %s3
  %s6 = scalar_select 0, %s5, %s3
  $region1: #{tpu_custom_call.1} parent=0
    #allocation2 [shape = 'u8[8192]{0}', space=vmem, size = 0x2000, scoped, tag = 'input window, operand 0, single buffered']
    #allocation3 [shape = 's32[1]{0}', space=sflag, size = 0x4, scoped, tag = 'scoped memory for tpu_custom_call.1']
    #allocation4 [shape = 's32[1]{0}', space=sflag, size = 0x4, scoped, tag = 'scoped memory for tpu_custom_call.1']
    #allocation5 [shape = 'u8[8192]{0}', space=vmem, size = 0x2000, scoped, tag = 'output window, operand 0, single buffered']
    %7 = vsyncpa [#allocation3], 0
    %8 = vsyncpa [#allocation4], 0
    // Predicated region
    $region2: #{tpu_custom_call.1} parent=1 // pred_check
      _
    $region3: #{tpu_custom_call.1} parent=1 // pred_check_branch
      %10 = sbr.rel (0) target = $region5
    $region4: #{tpu_custom_call.1} parent=1 // pred_region
      %s12 = ssub.s32 256, 256
      %13 = vsyncadd [#allocation3], %s12
      %s15 = sshll.u32 [#allocation2], 4
      %s16 = int_to_ptr.vmem [resolvable:$true] %s15
      %18 = dma.hbm_to_vmem [thread:$0]  %s0, 256, %s16, [#allocation3]
    $region5: #{tpu_custom_call.1} parent=1 // pred_fallthru
      _
    // Predicated region
    $region6: #{tpu_custom_call.1} parent=1 // pred_check
      _
    $region7: #{tpu_custom_call.1} parent=1 // pred_check_branch
      %20 = sbr.rel (0) target = $region9
    $region8: #{tpu_custom_call.1} parent=1 // pred_region
      _
    $region9: #{tpu_custom_call.1} parent=1 // pred_fallthru
      _
    // Predicated region
    $region10: #{tpu_custom_call.1} parent=1 // pred_check
      _
    $region11: #{tpu_custom_call.1} parent=1 // pred_check_branch
      %22 = sbr.rel (0) target = $region13
    $region12: #{tpu_custom_call.1} parent=1 // pred_region
      %23 = dma.done [#allocation3], 256
    $region13: #{tpu_custom_call.1} parent=1 // pred_fallthru
      _
    %s24 = smul.u32 0, 8
    %s25 = scalar_lea.vmem %s1, %s24
    %v26 = vld [vmem:[%s25] sm:$0xff]
    %v27 = vld [vmem:[#allocation2] sm:$0xff]
    %v28 = vld [vmem:[#allocation2 + $0x8] sm:$0xff]
    %v29 = vadd.f32 %v27, %v28
    %30 = vadd.xlane.f32.xlu0 %v29
    %v31 = vpop.xlane.xlu0 %30
    %v32 = vmul.f32 %v31, 0.00390625
    %v33 = vsub.f32 %v27, %v32
    %v34 = vsub.f32 %v28, %v32
    %v35 = vmul.f32 %v33, %v33
    %v36 = vmul.f32 %v34, %v34
    %v37 = vadd.f32 %v35, %v36
    %38 = vadd.xlane.f32.xlu0 %v37
    %v39 = vpop.xlane.xlu0 %38
    %v40 = vmul.f32 %v39, 0.00390625
    %v41 = vadd.f32 %v40, 1e-05
    %v42 = vrsqrt.pop %v41
    %v43 = vmul.f32 %v42, %v26
    %45 = vset.pattern.permute.xlu0 1
    %46 = vperm.xlu0 %45, %v43
    %v47 = vpop.permute.xlu0 %46
    %v49 = vmul.f32 %v33, %v47
    %v50 = vmul.f32 %v34, %v47
    %52 = vset.pattern.permute.xlu0 0
    %53 = vperm.xlu0 %52, %v26
    %v54 = vpop.permute.xlu0 %53
    %v56 = vadd.f32 %v49, %v54
    %v57 = vadd.f32 %v50, %v54
    %58 = vst [vmem:[#allocation5] sm:$0xff] %v56
    %59 = vst [vmem:[#allocation5 + $0x8] sm:$0xff] %v57
    // Predicated region
    $region14: #{tpu_custom_call.1} parent=1 // pred_check
      _
    $region15: #{tpu_custom_call.1} parent=1 // pred_check_branch
      %61 = sbr.rel (0) target = $region17
    $region16: #{tpu_custom_call.1} parent=1 // pred_region
      %s63 = ssub.s32 256, 256
      %64 = vsyncadd [#allocation4], %s63
      %s66 = sshll.u32 [#allocation5], 4
      %s67 = int_to_ptr.vmem [resolvable:$true] %s66
      %69 = dma.vmem_to_hbm [thread:$0]  %s67, 256, %s2, [#allocation4]
    $region17: #{tpu_custom_call.1} parent=1 // pred_fallthru
      _
    // Predicated region
    $region18: #{tpu_custom_call.1} parent=1 // pred_check
      _
    $region19: #{tpu_custom_call.1} parent=1 // pred_check_branch
      %71 = sbr.rel (0) target = $region21
    $region20: #{tpu_custom_call.1} parent=1 // pred_region
      %72 = dma.done [#allocation4], 256
    $region21: #{tpu_custom_call.1} parent=1 // pred_fallthru
      _
    %73 = vsyncpa [#allocation3], 1
    %74 = vsyncpa [#allocation4], 1

</llo_original>
